<compile_context>
chip_gen: v7x
topology: tpu7x:2x2x1
jax: 0.10.0
libtpu: 0.0.40
codegen_flags: <defaults>
</compile_context>

<pallas_src>
import functools

import jax
import jax.numpy as jnp
from jax.experimental import pallas as pl
from jax.experimental.pallas import tpu as pltpu

_EPS = 1e-12  # F.normalize eps


def _round_up(x, mult):
    return ((x + mult - 1) // mult) * mult


def _normalize_kernel(x_ref, scaled_ref, mm_ref, *, scale):
    """Row-wise L2 normalize: scaled = scale * x / max(||x||, eps)."""
    x = x_ref[...]                                            # (R_tile, E) f32
    sumsq = jnp.sum(x * x, axis=-1, keepdims=True)
    # rsqrt(max(sum_sq, eps^2)) == 1 / max(||x||, eps)  (F.normalize semantics);
    # zero-padded rows stay exactly zero.
    inv = jax.lax.rsqrt(jnp.maximum(sumsq, jnp.float32(_EPS * _EPS)))
    n = x * inv
    scaled_ref[...] = jnp.float32(scale) * n                  # f32 module output
    mm_ref[...] = n.astype(mm_ref.dtype)                      # MXU operand copy


def _normalize_rows(x, *, scale, mm_dtype, r_tile):
    rows, e = x.shape
    grid = (rows // r_tile,)
    return pl.pallas_call(
        functools.partial(_normalize_kernel, scale=float(scale)),
        out_shape=(jax.ShapeDtypeStruct((rows, e), jnp.float32),
                   jax.ShapeDtypeStruct((rows, e), mm_dtype)),
        grid=grid,
        in_specs=[pl.BlockSpec((r_tile, e), lambda i: (i, 0))],
        out_specs=(pl.BlockSpec((r_tile, e), lambda i: (i, 0)),
                   pl.BlockSpec((r_tile, e), lambda i: (i, 0))),
        compiler_params=pltpu.CompilerParams(
            dimension_semantics=("parallel",)),
    )(x)


def _logits_kernel(label_ref, nemb_ref, nw_ref, logits_ref, mlogits_ref,
                   *, s, m, c_tile):
    j = pl.program_id(1)

    # MXU: contract both operands on their last (E) axis -> (B_tile, C_tile).
    logits = jax.lax.dot_general(
        nemb_ref[...], nw_ref[...],
        dimension_numbers=(((1,), (1,)), ((), ())),
        preferred_element_type=jnp.float32)

    # scatter_(1, label, m) -> one-hot compare against this tile's class ids.
    label = label_ref[...]                                    # (B_tile, 1) int32
    cls = j * c_tile + jax.lax.broadcasted_iota(jnp.int32, logits.shape, 1)
    margin = jnp.where(cls == label, jnp.float32(m), jnp.float32(0.0))

    logits_ref[...] = logits
    mlogits_ref[...] = jnp.float32(s) * (logits - margin)


def lmcl_forward(embedding, weights, label, *, s, m,
                 use_bf16_matmul=True, block_b=256, block_c=512):
    """embedding: (B, E) f32, weights: (C, E) f32, label: (B,) int."""
    B, E = embedding.shape
    C, E2 = weights.shape
    assert E2 == E, "embedding size wrong"

    f32 = jnp.float32
    # Lane/sublane-friendly padded sizes and tile sizes.
    e_pad = _round_up(E, 128)
    b_tile = min(block_b, _round_up(B, 8))      # multiple of 8
    c_tile = min(block_c, _round_up(C, 128))    # multiple of 128 (lane dense)
    b_pad = _round_up(B, b_tile)
    c_pad = _round_up(C, c_tile)

    emb_p = jnp.zeros((b_pad, e_pad), f32).at[:B, :E].set(embedding.astype(f32))
    w_p = jnp.zeros((c_pad, e_pad), f32).at[:C, :E].set(weights.astype(f32))
    label_p = jnp.zeros((b_pad, 1), jnp.int32).at[:B, 0].set(
        label.astype(jnp.int32))

    mm_dtype = jnp.bfloat16 if use_bf16_matmul else jnp.float32

    # Hoisted normalizations: computed exactly once each.
    semb_p, nemb_mm = _normalize_rows(emb_p, scale=s, mm_dtype=mm_dtype,
                                      r_tile=b_tile)
    nw_p, nw_mm = _normalize_rows(w_p, scale=1.0, mm_dtype=mm_dtype,
                                  r_tile=c_tile)

    grid = (b_pad // b_tile, c_pad // c_tile)
    mm_bytes = jnp.dtype(mm_dtype).itemsize
    cost = pl.CostEstimate(
        flops=2 * b_pad * c_pad * e_pad,
        transcendentals=0,
        bytes_accessed=(grid[1] * b_pad * e_pad * mm_bytes
                        + grid[0] * c_pad * e_pad * mm_bytes
                        + grid[1] * b_pad * 4
                        + 2 * b_pad * c_pad * 4))

    logits_p, mlogits_p = pl.pallas_call(
        functools.partial(_logits_kernel, s=float(s), m=float(m),
                          c_tile=c_tile),
        out_shape=(jax.ShapeDtypeStruct((b_pad, c_pad), f32),
                   jax.ShapeDtypeStruct((b_pad, c_pad), f32)),
        grid=grid,
        in_specs=[pl.BlockSpec((b_tile, 1), lambda i, j: (i, 0)),
                  pl.BlockSpec((b_tile, e_pad), lambda i, j: (i, 0)),
                  pl.BlockSpec((c_tile, e_pad), lambda i, j: (j, 0))],
        out_specs=(pl.BlockSpec((b_tile, c_tile), lambda i, j: (i, j)),
                   pl.BlockSpec((b_tile, c_tile), lambda i, j: (i, j))),
        compiler_params=pltpu.CompilerParams(
            dimension_semantics=("parallel", "parallel")),
        cost_estimate=cost,
    )(label_p, nemb_mm, nw_mm)

    return (logits_p[:B, :C], mlogits_p[:B, :C],
            semb_p[:B, :E], nw_p[:C, :E])


if __name__ == "__main__":
    def normalize_ref(x, eps=_EPS):
        n = jnp.sqrt(jnp.sum(x * x, axis=-1, keepdims=True))
        return x / jnp.maximum(n, eps)

    def reference(embedding, weights, label, s, m):
        n_e = normalize_ref(embedding)
        n_w = normalize_ref(weights)
        # Exact f32 reference logits (elementwise-mul + reduce, no MXU).
        logits = jnp.sum(n_e[:, None, :] * n_w[None, :, :], axis=-1)
        margin = jax.nn.one_hot(label, weights.shape[0], dtype=jnp.float32) * m
        return logits, s * (logits - margin), s * n_e, n_w

    key = jax.random.PRNGKey(0)
    s_param, m_param = 30.0, 0.35

    # Config 1: module-sized tiny shapes (single-tile grid).
    # Config 2: non-aligned shapes with small blocks to exercise a 2x2 grid.
    configs = [
        dict(B=8, E=32, C=16, block_b=256, block_c=512),
        dict(B=12, E=40, C=200, block_b=8, block_c=128),
    ]

    for cfg in configs:
        key, k_emb, k_w, k_lbl = jax.random.split(key, 4)
        B, E, C = cfg["B"], cfg["E"], cfg["C"]
        embedding = jax.random.normal(k_emb, (B, E), dtype=jnp.float32)
        # kaiming_normal_ on (C, E): std = sqrt(2 / fan_in), fan_in = E.
        weights = (jax.random.normal(k_w, (C, E), dtype=jnp.float32)
                   * jnp.sqrt(2.0 / E))
        label = jax.random.randint(k_lbl, (B,), 0, C, dtype=jnp.int32)

        ref = reference(embedding, weights, label, s_param, m_param)

        # Default path: bf16 MXU operands, f32 accumulation (loose logits tol).
        out = lmcl_forward(embedding, weights, label, s=s_param, m=m_param,
                           use_bf16_matmul=True,
                           block_b=cfg["block_b"], block_c=cfg["block_c"])
        jax.block_until_ready(out)
        assert out[0].shape == (B, C) and out[1].shape == (B, C)
        assert out[2].shape == (B, E) and out[3].shape == (C, E)
        assert jnp.allclose(out[0], ref[0], atol=3e-2)
        assert jnp.allclose(out[1], ref[1], atol=1.0)
        assert jnp.allclose(out[2], ref[2], atol=1e-4)
        assert jnp.allclose(out[3], ref[3], atol=1e-4)

        # Full-precision path: f32 MXU operands (tight parity).
        out32 = lmcl_forward(embedding, weights, label, s=s_param, m=m_param,
                             use_bf16_matmul=False,
                             block_b=cfg["block_b"], block_c=cfg["block_c"])
        jax.block_until_ready(out32)
        assert jnp.allclose(out32[0], ref[0], atol=2e-3)
        assert jnp.allclose(out32[1], ref[1], atol=1e-1)
        assert jnp.allclose(out32[2], ref[2], atol=1e-4)
        assert jnp.allclose(out32[3], ref[3], atol=1e-4)

    print("KERNEL_OK")
</pallas_src>

<mosaic_0001>
module attributes {stable_mosaic.version = 11 : i64} {
  func.func @_normalize_kernel(%arg0: i32, %arg1: memref<8x128xf32, #tpu.memory_space<vmem>>, %arg2: memref<8x128xf32, #tpu.memory_space<vmem>>, %arg3: memref<8x128xbf16, #tpu.memory_space<vmem>>) attributes {dimension_semantics = [#tpu.dimension_semantics<parallel>], iteration_bounds = array<i64: 1>, scalar_prefetch = 0 : i64, scratch_operands = 0 : i64, tpu.core_type = #tpu.core_type<tc>, window_params = [{transform_indices = @transform_0, window_bounds = array<i64: 8, 128>}, {transform_indices = @transform_1, window_bounds = array<i64: 8, 128>}, {transform_indices = @transform_2, window_bounds = array<i64: 8, 128>}]} {
    %c0 = arith.constant 0 : index
    %c0_0 = arith.constant 0 : index
    %0 = vector.load %arg1[%c0, %c0_0] : memref<8x128xf32, #tpu.memory_space<vmem>>, vector<8x128xf32>
    %1 = arith.mulf %0, %0 : vector<8x128xf32>
    %cst = arith.constant dense<0.000000e+00> : vector<8xf32>
    %2 = vector.multi_reduction <add>, %1, %cst [1] : vector<8x128xf32> to vector<8xf32>
    %3 = vector.shape_cast %2 : vector<8xf32> to vector<8x1xf32>
    %cst_1 = arith.constant 1.000000e-24 : f32
    %4 = vector.broadcast %cst_1 : f32 to vector<8x1xf32>
    %5 = arith.maximumf %3, %4 : vector<8x1xf32>
    %6 = math.rsqrt %5 : vector<8x1xf32>
    %7 = vector.broadcast %6 : vector<8x1xf32> to vector<8x128xf32>
    %8 = arith.mulf %0, %7 : vector<8x128xf32>
    %cst_2 = arith.constant 3.000000e+01 : f32
    %9 = vector.broadcast %cst_2 : f32 to vector<8x128xf32>
    %10 = arith.mulf %9, %8 : vector<8x128xf32>
    %c0_3 = arith.constant 0 : index
    %c0_4 = arith.constant 0 : index
    %11 = vector.load %arg2[%c0_3, %c0_4] : memref<8x128xf32, #tpu.memory_space<vmem>>, vector<8x128xf32>
    tpu.vector_store %arg2[%c0_3, %c0_4], %10 {strides = array<i32>} : memref<8x128xf32, #tpu.memory_space<vmem>>, vector<8x128xf32>,
    %12 = arith.truncf %8 : vector<8x128xf32> to vector<8x128xbf16>
    %c0_5 = arith.constant 0 : index
    %c0_6 = arith.constant 0 : index
    %13 = vector.load %arg3[%c0_5, %c0_6] : memref<8x128xbf16, #tpu.memory_space<vmem>>, vector<8x128xbf16>
    tpu.vector_store %arg3[%c0_5, %c0_6], %12 {strides = array<i32>} : memref<8x128xbf16, #tpu.memory_space<vmem>>, vector<8x128xbf16>,
    return
  }
  func.func @transform_0(%arg0: i32) -> (i32, i32) {
    %c0_i32 = arith.constant 0 : i32
    %c0_i32_0 = arith.constant 0 : i32
    return %arg0, %c0_i32 : i32, i32
  }
  func.func @transform_1(%arg0: i32) -> (i32, i32) {
    %c0_i32 = arith.constant 0 : i32
    %c0_i32_0 = arith.constant 0 : i32
    return %arg0, %c0_i32 : i32, i32
  }
  func.func @transform_2(%arg0: i32) -> (i32, i32) {
    %c0_i32 = arith.constant 0 : i32
    %c0_i32_0 = arith.constant 0 : i32
    return %arg0, %c0_i32 : i32, i32
  }
}

</mosaic_0001>

<llo_original>
// kernel: tpu_custom_call.1
$region0: #{tpu_custom_call.1}
  #allocation0 [shape = 'u32[]', space=smem, size = 0x4, offset = 0x4, fixed_abs, tag = 'smem constant byte address 0x4 - core index']
  #allocation1 [shape = 'u32[144,128]{1,0:T(1,128)}', space=vmem, size = 0x12000, scoped, tag = 'internal scratch']
  %s0 = inlined_call_operand.hbm [shape: f32[8,128], index: 0, kind: input, shape index: {}]
  %s1 = inlined_call_operand.hbm [shape: f32[8,128], index: 1, kind: output, shape index: {0}]
  %s2 = inlined_call_operand.hbm [shape: bf16[8,128], index: 2, kind: output, shape index: {1}]
  %3 = xla_tuple %s1, %s2
  %s4 = sld [smem:[#allocation0]]
  $region26: #{tpu_custom_call.1} parent=0
    _
  %s6 = ssub.s32 1, %s4
  %s7 = scalar_select 0, %s6, %s4
  $region1: #{tpu_custom_call.1} parent=0
    #allocation2 [shape = 'u8[4096]{0}', space=vmem, size = 0x1000, scoped, tag = 'input window, operand 0, single buffered']
    #allocation3 [shape = 's32[1]{0}', space=sflag, size = 0x4, scoped, tag = 'scoped memory for tpu_custom_call.1']
    #allocation4 [shape = 's32[1]{0}', space=sflag, size = 0x4, scoped, tag = 'scoped memory for tpu_custom_call.1']
    #allocation5 [shape = 'u8[4096]{0}', space=vmem, size = 0x1000, scoped, tag = 'output window, operand 0, single buffered']
    #allocation6 [shape = 'u8[2048]{0}', space=vmem, size = 0x800, scoped, tag = 'output window, operand 1, single buffered']
    #allocation7 [shape = 's32[1]{0}', space=sflag, size = 0x4, scoped, tag = 'scoped memory for tpu_custom_call.1']
    %8 = vsyncpa [#allocation3], 0
    %9 = vsyncpa [#allocation4], 0
    %10 = vsyncpa [#allocation7], 0
    // Predicated region
    $region2: #{tpu_custom_call.1} parent=1 // pred_check
      _
    $region3: #{tpu_custom_call.1} parent=1 // pred_check_branch
      %12 = sbr.rel (0) target = $region5
    $region4: #{tpu_custom_call.1} parent=1 // pred_region
      %s14 = ssub.s32 128, 128
      %15 = vsyncadd [#allocation3], %s14
      %s17 = sshll.u32 [#allocation2], 4
      %s18 = int_to_ptr.vmem [resolvable:$true] %s17
      %20 = dma.hbm_to_vmem [thread:$0]  %s0, 128, %s18, [#allocation3]
    $region5: #{tpu_custom_call.1} parent=1 // pred_fallthru
      _
    // Predicated region
    $region6: #{tpu_custom_call.1} parent=1 // pred_check
      _
    $region7: #{tpu_custom_call.1} parent=1 // pred_check_branch
      %22 = sbr.rel (0) target = $region9
    $region8: #{tpu_custom_call.1} parent=1 // pred_region
      %23 = dma.done [#allocation3], 128
    $region9: #{tpu_custom_call.1} parent=1 // pred_fallthru
      _
    %v24 = vld [vmem:[#allocation2] sm:$0xff]
    %v25 = vmul.f32 %v24, %v24
    %26 = vadd.xlane.f32.xlu0 %v25
    %v27 = vpop.xlane.xlu0 %26
    %v28 = vmax.f32 %v27, 1e-24
    %v29 = vrsqrt.pop %v28
    %v30 = vmul.f32 %v24, %v29
    %v31 = vmul.f32 %v30, 30.0
    %32 = vst [vmem:[#allocation5] sm:$0xff] %v31
    %v33 = vpack.c.bf16 %v30, %v30
    %34 = vst [vmem:[#allocation6] sm:$0xf] %v33
    // Predicated region
    $region10: #{tpu_custom_call.1} parent=1 // pred_check
      _
    $region11: #{tpu_custom_call.1} parent=1 // pred_check_branch
      %36 = sbr.rel (0) target = $region13
    $region12: #{tpu_custom_call.1} parent=1 // pred_region
      %s38 = ssub.s32 128, 128
      %39 = vsyncadd [#allocation4], %s38
      %s41 = sshll.u32 [#allocation5], 4
      %s42 = int_to_ptr.vmem [resolvable:$true] %s41
      %44 = dma.vmem_to_hbm [thread:$0]  %s42, 128, %s1, [#allocation4]
    $region13: #{tpu_custom_call.1} parent=1 // pred_fallthru
      _
    // Predicated region
    $region14: #{tpu_custom_call.1} parent=1 // pred_check
      _
    $region15: #{tpu_custom_call.1} parent=1 // pred_check_branch
      %46 = sbr.rel (0) target = $region17
    $region16: #{tpu_custom_call.1} parent=1 // pred_region
      %s48 = ssub.s32 64, 64
      %49 = vsyncadd [#allocation7], %s48
      %s51 = sshll.u32 [#allocation6], 4
      %s52 = int_to_ptr.vmem [resolvable:$true] %s51
      %54 = dma.vmem_to_hbm [thread:$0]  %s52, 64, %s2, [#allocation7]
    $region17: #{tpu_custom_call.1} parent=1 // pred_fallthru
      _
    // Predicated region
    $region18: #{tpu_custom_call.1} parent=1 // pred_check
      _
    $region19: #{tpu_custom_call.1} parent=1 // pred_check_branch
      %56 = sbr.rel (0) target = $region21
    $region20: #{tpu_custom_call.1} parent=1 // pred_region
      %57 = dma.done [#allocation4], 128
    $region21: #{tpu_custom_call.1} parent=1 // pred_fallthru
      _
    // Predicated region
    $region22: #{tpu_custom_call.1} parent=1 // pred_check
      _
    $region23: #{tpu_custom_call.1} parent=1 // pred_check_branch
      %59 = sbr.rel (0) target = $region25
    $region24: #{tpu_custom_call.1} parent=1 // pred_region
      %60 = dma.done [#allocation7], 64
    $region25: #{tpu_custom_call.1} parent=1 // pred_fallthru
      _
    %61 = vsyncpa [#allocation3], 1
    %62 = vsyncpa [#allocation4], 1
    %63 = vsyncpa [#allocation7], 1

</llo_original>
